<compile_context>
chip_gen: v7x
topology: tpu7x:2x2x1
jax: 0.10.0
libtpu: 0.0.40
codegen_flags: <defaults>
</compile_context>

<pallas_src>
import jax
import jax.numpy as jnp
from jax.experimental import pallas as pl
from jax.experimental.pallas import tpu as pltpu

_LANES = 128     # vreg lane count (last dim)
_SUBLANES = 8    # vreg sublane count (second-to-last dim)


def _round_up(a: int, m: int) -> int:
    return ((a + m - 1) // m) * m


def _linear11_kernel(w_ref, b_ref, x_ref, o_ref):
    # w_ref, b_ref: (1, 1) scalars in SMEM; x_ref, o_ref: (block_rows, 128) in VMEM.
    w = w_ref[0, 0]
    b = b_ref[0, 0]
    o_ref[...] = x_ref[...] * w + b


def my_linear_new_forward(x, w, b, *, block_rows: int = 2048):
    """Equivalent of MyLinear_new.forward.

    x: (N,) float32
    w: scalar float32 (Linear(1,1).weight collapsed)
    b: scalar float32 (Linear(1,1).bias collapsed)
    block_rows: rows (of 128 lanes) per grid step; 2048 rows * 128 * 4B = 1 MiB
                per f32 block, so 4 live double-buffered blocks stay well under
                the default scoped-VMEM limit on v5e/v6e/v7x.
    returns: (N,) float32
    """
    n = x.shape[0]
    x = x.astype(jnp.float32)

    # Lane-dense, sublane-dense padded layout: (rows_padded, 128).
    rows = max(1, -(-n // _LANES))                      # ceil(n / 128)
    tm = min(block_rows, _round_up(rows, _SUBLANES))    # tile rows, multiple of 8
    rows_padded = _round_up(rows, tm)                   # grid divides evenly
    total = rows_padded * _LANES

    x2 = jnp.pad(x, (0, total - n)).reshape(rows_padded, _LANES)
    w2 = jnp.asarray(w, jnp.float32).reshape(1, 1)
    b2 = jnp.asarray(b, jnp.float32).reshape(1, 1)

    num_blocks = rows_padded // tm

    out = pl.pallas_call(
        _linear11_kernel,
        out_shape=jax.ShapeDtypeStruct((rows_padded, _LANES), jnp.float32),
        grid=(num_blocks,),
        in_specs=[
            pl.BlockSpec(memory_space=pltpu.SMEM),            # w scalar
            pl.BlockSpec(memory_space=pltpu.SMEM),            # b scalar
            pl.BlockSpec((tm, _LANES), lambda i: (i, 0)),     # x tile
        ],
        out_specs=pl.BlockSpec((tm, _LANES), lambda i: (i, 0)),
        # x2 (3rd input) has identical shape/dtype to the output -> reuse buffer.
        input_output_aliases={2: 0},
        compiler_params=pltpu.CompilerParams(
            dimension_semantics=("parallel",),  # shard grid across TCs on v7x
        ),
    )(w2, b2, x2)

    # Drop the padded tail (pad region holds w*0 + b = b, must not leak).
    return out.reshape(total)[:n]


if __name__ == "__main__":
    key = jax.random.PRNGKey(0)
    kw, kb = jax.random.split(key, 2)

    # Parameter init mimicking torch.nn.Linear(1,1):
    # uniform(-1/sqrt(in_features), 1/sqrt(in_features)) with in_features=1.
    w = jax.random.uniform(kw, (), jnp.float32, minval=-1.0, maxval=1.0)
    b = jax.random.uniform(kb, (), jnp.float32, minval=-1.0, maxval=1.0)

    # Input consistent with the module's usage: torch.arange(100)/100.
    n = 100
    x = jnp.arange(n, dtype=jnp.float32) / n

    y = jax.block_until_ready(my_linear_new_forward(x, w, b))
    y_ref = x * w + b
    assert y.shape == (n,)
    assert jnp.allclose(y, y_ref, atol=1e-6, rtol=1e-6)

    # Second (still small) check that exercises the multi-block tiled path:
    # rows = ceil(5000/128) = 40, block_rows=8 -> grid of 5 steps.
    n2 = 5000
    x2 = jnp.arange(n2, dtype=jnp.float32) / n2
    y2 = jax.block_until_ready(my_linear_new_forward(x2, w, b, block_rows=8))
    assert y2.shape == (n2,)
    assert jnp.allclose(y2, x2 * w + b, atol=1e-6, rtol=1e-6)

    print("KERNEL_OK")
</pallas_src>

<mosaic_0001>
module attributes {stable_mosaic.version = 11 : i64} {
  func.func @_linear11_kernel(%arg0: i32, %arg1: memref<1x1xf32, #tpu.memory_space<smem>>, %arg2: memref<1x1xf32, #tpu.memory_space<smem>>, %arg3: memref<8x128xf32, #tpu.memory_space<vmem>>, %arg4: memref<8x128xf32, #tpu.memory_space<vmem>>) attributes {dimension_semantics = [#tpu.dimension_semantics<parallel>], iteration_bounds = array<i64: 1>, scalar_prefetch = 0 : i64, scratch_operands = 0 : i64, tpu.core_type = #tpu.core_type<tc>, window_params = [{transform_indices = @transform_0, window_bounds = array<i64: 1, 1>}, {transform_indices = @transform_1, window_bounds = array<i64: 1, 1>}, {transform_indices = @transform_2, window_bounds = array<i64: 8, 128>}, {transform_indices = @transform_3, window_bounds = array<i64: 8, 128>}]} {
    %c0 = arith.constant 0 : index
    %c0_0 = arith.constant 0 : index
    %0 = memref.load %arg1[%c0, %c0_0] : memref<1x1xf32, #tpu.memory_space<smem>>
    %c0_1 = arith.constant 0 : index
    %c0_2 = arith.constant 0 : index
    %1 = memref.load %arg2[%c0_1, %c0_2] : memref<1x1xf32, #tpu.memory_space<smem>>
    %c0_3 = arith.constant 0 : index
    %c0_4 = arith.constant 0 : index
    %2 = vector.load %arg3[%c0_3, %c0_4] : memref<8x128xf32, #tpu.memory_space<vmem>>, vector<8x128xf32>
    %3 = vector.broadcast %0 : f32 to vector<8x128xf32>
    %4 = arith.mulf %2, %3 : vector<8x128xf32>
    %5 = vector.broadcast %1 : f32 to vector<8x128xf32>
    %6 = arith.addf %4, %5 : vector<8x128xf32>
    %c0_5 = arith.constant 0 : index
    %c0_6 = arith.constant 0 : index
    %7 = vector.load %arg4[%c0_5, %c0_6] : memref<8x128xf32, #tpu.memory_space<vmem>>, vector<8x128xf32>
    tpu.vector_store %arg4[%c0_5, %c0_6], %6 {strides = array<i32>} : memref<8x128xf32, #tpu.memory_space<vmem>>, vector<8x128xf32>,
    return
  }
  func.func @transform_0(%arg0: i32) -> (i32, i32) {
    %c0_i32 = arith.constant 0 : i32
    %c0_i32_0 = arith.constant 0 : i32
    %c0_i32_1 = arith.constant 0 : i32
    return %c0_i32, %c0_i32_0 : i32, i32
  }
  func.func @transform_1(%arg0: i32) -> (i32, i32) {
    %c0_i32 = arith.constant 0 : i32
    %c0_i32_0 = arith.constant 0 : i32
    %c0_i32_1 = arith.constant 0 : i32
    return %c0_i32, %c0_i32_0 : i32, i32
  }
  func.func @transform_2(%arg0: i32) -> (i32, i32) {
    %c0_i32 = arith.constant 0 : i32
    %c0_i32_0 = arith.constant 0 : i32
    return %arg0, %c0_i32 : i32, i32
  }
  func.func @transform_3(%arg0: i32) -> (i32, i32) {
    %c0_i32 = arith.constant 0 : i32
    %c0_i32_0 = arith.constant 0 : i32
    return %arg0, %c0_i32 : i32, i32
  }
}

</mosaic_0001>

<llo_original>
// kernel: tpu_custom_call.1
$region0: #{tpu_custom_call.1}
  #allocation0 [shape = 'u32[]', space=smem, size = 0x4, offset = 0x4, fixed_abs, tag = 'smem constant byte address 0x4 - core index']
  #allocation1 [shape = 'u32[144,128]{1,0:T(1,128)}', space=vmem, size = 0x12000, scoped, tag = 'internal scratch']
  #allocation2 [shape = 'f32[1,1]{1,0:T(1,128)S(6)}', space=smem, size = 0x200, scoped, tag = 'scoped memory for tpu_custom_call.1']
  #allocation3 [shape = 'f32[1,1]{1,0:T(1,128)S(6)}', space=smem, size = 0x200, scoped, tag = 'scoped memory for tpu_custom_call.1']
  %s0 = inlined_call_operand.<no memory space> [shape: f32[1,1], index: 0, kind: input, shape index: {}]
  %s1 = inlined_call_operand.<no memory space> [shape: f32[1,1], index: 1, kind: input, shape index: {}]
  %s2 = inlined_call_operand.hbm [shape: f32[8,128], index: 2, kind: input, shape index: {}, may-alias: {2,3}]
  %s3 = inlined_call_operand.hbm [shape: f32[8,128], index: 3, kind: output, shape index: {}, may-alias: {2,3}]
  %s4 = sld [smem:[#allocation0]]
  $region26: #{tpu_custom_call.1} parent=0
    _
  %s6 = ssub.s32 1, %s4
  %s7 = scalar_select 0, %s6, %s4
  %8 = sst [smem:[#allocation2]] %s0
  %9 = sst [smem:[#allocation3]] %s1
  $region1: #{tpu_custom_call.1} parent=0
    #allocation4 [shape = 'u8[4096]{0}', space=vmem, size = 0x1000, scoped, tag = 'input window, operand 2, single buffered']
    #allocation5 [shape = 's32[1]{0}', space=sflag, size = 0x4, scoped, tag = 'scoped memory for tpu_custom_call.1']
    #allocation6 [shape = 's32[1]{0}', space=sflag, size = 0x4, scoped, tag = 'scoped memory for tpu_custom_call.1']
    #allocation7 [shape = 'u8[4096]{0}', space=vmem, size = 0x1000, scoped, tag = 'output window, operand 0, single buffered']
    %10 = vsyncpa [#allocation5], 0
    %11 = vsyncpa [#allocation6], 0
    // Predicated region
    $region2: #{tpu_custom_call.1} parent=1 // pred_check
      _
    $region3: #{tpu_custom_call.1} parent=1 // pred_check_branch
      %13 = sbr.rel (0) target = $region5
    $region4: #{tpu_custom_call.1} parent=1 // pred_region
      _
    $region5: #{tpu_custom_call.1} parent=1 // pred_fallthru
      _
    // Predicated region
    $region6: #{tpu_custom_call.1} parent=1 // pred_check
      _
    $region7: #{tpu_custom_call.1} parent=1 // pred_check_branch
      %15 = sbr.rel (0) target = $region9
    $region8: #{tpu_custom_call.1} parent=1 // pred_region
      _
    $region9: #{tpu_custom_call.1} parent=1 // pred_fallthru
      _
    // Predicated region
    $region10: #{tpu_custom_call.1} parent=1 // pred_check
      _
    $region11: #{tpu_custom_call.1} parent=1 // pred_check_branch
      %17 = sbr.rel (0) target = $region13
    $region12: #{tpu_custom_call.1} parent=1 // pred_region
      %s19 = ssub.s32 128, 128
      %20 = vsyncadd [#allocation5], %s19
      %s22 = sshll.u32 [#allocation4], 4
      %s23 = int_to_ptr.vmem [resolvable:$true] %s22
      %25 = dma.hbm_to_vmem [thread:$0]  %s2, 128, %s23, [#allocation5]
    $region13: #{tpu_custom_call.1} parent=1 // pred_fallthru
      _
    // Predicated region
    $region14: #{tpu_custom_call.1} parent=1 // pred_check
      _
    $region15: #{tpu_custom_call.1} parent=1 // pred_check_branch
      %27 = sbr.rel (0) target = $region17
    $region16: #{tpu_custom_call.1} parent=1 // pred_region
      %28 = dma.done [#allocation5], 128
    $region17: #{tpu_custom_call.1} parent=1 // pred_fallthru
      _
    %s29 = sld [smem:[#allocation2]]
    %s30 = sld [smem:[#allocation3]]
    %v31 = vld [vmem:[#allocation4] sm:$0xff]
    %v32 = vstv %s29
    %v33 = vmul.f32 %v31, %v32
    %v34 = vstv %s30
    %v35 = vadd.f32 %v33, %v34
    %36 = vst [vmem:[#allocation7] sm:$0xff] %v35
    // Predicated region
    $region18: #{tpu_custom_call.1} parent=1 // pred_check
      _
    $region19: #{tpu_custom_call.1} parent=1 // pred_check_branch
      %38 = sbr.rel (0) target = $region21
    $region20: #{tpu_custom_call.1} parent=1 // pred_region
      %s40 = ssub.s32 128, 128
      %41 = vsyncadd [#allocation6], %s40
      %s43 = sshll.u32 [#allocation7], 4
      %s44 = int_to_ptr.vmem [resolvable:$true] %s43
      %46 = dma.vmem_to_hbm [thread:$0]  %s44, 128, %s3, [#allocation6]
    $region21: #{tpu_custom_call.1} parent=1 // pred_fallthru
      _
    // Predicated region
    $region22: #{tpu_custom_call.1} parent=1 // pred_check
      _
    $region23: #{tpu_custom_call.1} parent=1 // pred_check_branch
      %48 = sbr.rel (0) target = $region25
    $region24: #{tpu_custom_call.1} parent=1 // pred_region
      %49 = dma.done [#allocation6], 128
    $region25: #{tpu_custom_call.1} parent=1 // pred_fallthru
      _
    %50 = vsyncpa [#allocation5], 1
    %51 = vsyncpa [#allocation6], 1

</llo_original>
